<compile_context>
chip_gen: v7x
topology: tpu7x:2x2x1
jax: 0.10.0
libtpu: 0.0.40
codegen_flags: <defaults>
</compile_context>

<pallas_src>
import jax
import jax.numpy as jnp
from jax.experimental import pallas as pl
from jax.experimental.pallas import tpu as pltpu

HIDDEN = 512
_LANE = 128
_SUBLANE = 8
_TARGET_TILE_M = 1024  # amortize per-grid-step overhead (perf feedback)
_MAX_TILE_M = 2048     # keep footprint comfortably inside v7x's 64 MiB VMEM


def _round_up(x, m):
    return (x + m - 1) // m * m


def _tpu_kind():
    try:
        d = jax.devices()[0]
        if d.platform == "tpu":
            return d.device_kind.lower()
    except Exception:
        pass
    return ""


# ----------------------------------------------------------------------------
# Kernel: whole MLP fused.  Only the x tile (bf16) and the output tile (f32)
# move HBM<->VMEM per grid step; weights/biases are grid-invariant residents.
# ----------------------------------------------------------------------------
def mlp_kernel(x_ref, w1_ref, b1_ref, w2_ref, b2_ref, w3_ref, b3_ref, o_ref):
    x = x_ref[...]  # already bf16 in HBM (wrapper cast) -> no in-kernel convert

    h1 = jnp.dot(x, w1_ref[...], preferred_element_type=jnp.float32)
    h1 = jnp.maximum(h1 + b1_ref[...], 0.0).astype(jnp.bfloat16)

    h2 = jnp.dot(h1, w2_ref[...], preferred_element_type=jnp.float32)
    h2 = jnp.maximum(h2 + b2_ref[...], 0.0).astype(jnp.bfloat16)

    out = jnp.dot(h2, w3_ref[...], preferred_element_type=jnp.float32) + b3_ref[...]
    o_ref[...] = out.astype(o_ref.dtype)


# ----------------------------------------------------------------------------
# One-time weight preparation (outside the hot path): bf16 cast + lane padding
# of the output dimension, biases reshaped to (1, N) rows.
# ----------------------------------------------------------------------------
def prepare_params(params):
    out_dim = params["w3"].shape[1]
    out_p = _round_up(out_dim, _LANE)

    w1 = params["w1"].astype(jnp.bfloat16)
    w2 = params["w2"].astype(jnp.bfloat16)
    w3 = params["w3"].astype(jnp.bfloat16)
    b3 = params["b3"].astype(jnp.float32)
    if out_p != out_dim:
        w3 = jnp.pad(w3, ((0, 0), (0, out_p - out_dim)))
        b3 = jnp.pad(b3, (0, out_p - out_dim))

    return {
        "w1": w1,
        "b1": params["b1"].astype(jnp.float32).reshape(1, HIDDEN),
        "w2": w2,
        "b2": params["b2"].astype(jnp.float32).reshape(1, HIDDEN),
        "w3": w3,
        "b3": b3.reshape(1, out_p),
        "out_dim": out_dim,
    }


def _vmem_footprint_bytes(tile_m, in_dim, out_p):
    x_buf = 2 * tile_m * in_dim * 2            # bf16 x, double-buffered
    out_buf = 2 * tile_m * out_p * 4           # f32 out, double-buffered
    w_buf = 2 * (in_dim + HIDDEN + out_p) * HIDDEN * 2  # bf16 weights (x2 buffers)
    b_buf = 2 * (2 * HIDDEN + out_p) * 4
    interm = 3 * tile_m * HIDDEN * 4           # f32 h1/h2/out live intermediates
    return x_buf + out_buf + w_buf + b_buf + interm


# ----------------------------------------------------------------------------
# Forward pass.
# ----------------------------------------------------------------------------
def neural_network5(x, prepped, *, tile_m=None):
    """x: (B, in_dim) f32 or bf16; prepped: output of prepare_params()."""
    B, in_dim = x.shape
    out_p = prepped["w3"].shape[1]
    out_dim = prepped["out_dim"]

    kind = _tpu_kind()
    two_cores = "7" in kind  # v7x: 2 TensorCores per chip

    # ---- batch tile: sublane-aligned, big enough to amortize step overhead ---
    b8 = _round_up(B, _SUBLANE)
    if tile_m is None:
        n_tiles = pl.cdiv(b8, _TARGET_TILE_M)
        if two_cores and b8 >= 2 * _SUBLANE:
            # Make sure the "parallel" batch axis actually splits across both
            # TensorCores (>= 2 steps, even count).
            n_tiles = max(n_tiles, 2)
            if n_tiles % 2:
                n_tiles += 1
        tile_m = _round_up(pl.cdiv(b8, n_tiles), _SUBLANE)
    tile_m = min(_round_up(tile_m, _SUBLANE), _MAX_TILE_M)
    grid = (pl.cdiv(B, tile_m),)  # partial last block handled by Pallas masking

    # ---- x: only a dtype cast (intended to fuse into x's producer upstream);
    #      no pad / no HBM round-trip beyond the bf16 copy.
    x_bf = x if x.dtype == jnp.bfloat16 else x.astype(jnp.bfloat16)

    # ---- VMEM budget: footprint-derived, capped per generation ---------------
    cap = (56 << 20) if two_cores else (100 << 20)  # v7x: 64 MiB physical
    vmem_limit = int(min(max(2 * _vmem_footprint_bytes(tile_m, in_dim, out_p),
                             32 << 20), cap))

    # ---- cost hint for the XLA scheduler --------------------------------------
    flops = 2 * B * (in_dim * HIDDEN + HIDDEN * HIDDEN + HIDDEN * out_p)
    bytes_accessed = (
        B * in_dim * 2
        + (prepped["w1"].size + prepped["w2"].size + prepped["w3"].size) * 2
        + (prepped["b1"].size + prepped["b2"].size + prepped["b3"].size) * 4
        + B * out_p * 4
    )

    out = pl.pallas_call(
        mlp_kernel,
        out_shape=jax.ShapeDtypeStruct((B, out_p), jnp.float32),
        grid_spec=pltpu.PrefetchScalarGridSpec(
            num_scalar_prefetch=0,
            grid=grid,
            in_specs=[
                # activations: tiled & pipelined over the batch axis; K is the
                # full array dim (legal without 128-padding).
                pl.BlockSpec((tile_m, in_dim), lambda i: (i, 0)),
                # weights / biases: full blocks, grid-invariant (fetched once).
                pl.BlockSpec((in_dim, HIDDEN), lambda i: (0, 0)),
                pl.BlockSpec((1, HIDDEN), lambda i: (0, 0)),
                pl.BlockSpec((HIDDEN, HIDDEN), lambda i: (0, 0)),
                pl.BlockSpec((1, HIDDEN), lambda i: (0, 0)),
                pl.BlockSpec((HIDDEN, out_p), lambda i: (0, 0)),
                pl.BlockSpec((1, out_p), lambda i: (0, 0)),
            ],
            out_specs=pl.BlockSpec((tile_m, out_p), lambda i: (i, 0)),
        ),
        compiler_params=pltpu.CompilerParams(
            dimension_semantics=("parallel",),
            vmem_limit_bytes=vmem_limit,
        ),
        cost_estimate=pl.CostEstimate(
            flops=flops, transcendentals=0, bytes_accessed=bytes_accessed
        ),
    )(x_bf, prepped["w1"], prepped["b1"], prepped["w2"], prepped["b2"],
      prepped["w3"], prepped["b3"])

    return out if out_p == out_dim else out[:, :out_dim]


# ----------------------------------------------------------------------------
# Deterministic synthetic init (PyTorch-Linear-style uniform bounds).
# Weights stored transposed: (in_features, out_features).
# ----------------------------------------------------------------------------
def init_params(key, input_dim, output_dim):
    ks = jax.random.split(key, 6)

    def lin(kw, kb, fan_in, fan_out):
        bound = 1.0 / jnp.sqrt(float(fan_in))
        w = jax.random.uniform(kw, (fan_in, fan_out), jnp.float32, -bound, bound)
        b = jax.random.uniform(kb, (fan_out,), jnp.float32, -bound, bound)
        return w, b

    w1, b1 = lin(ks[0], ks[1], input_dim, HIDDEN)
    w2, b2 = lin(ks[2], ks[3], HIDDEN, HIDDEN)
    w3, b3 = lin(ks[4], ks[5], HIDDEN, output_dim)
    return {"w1": w1, "b1": b1, "w2": w2, "b2": b2, "w3": w3, "b3": b3}


def reference(x, p):
    # Full-f32 reference matching the PyTorch module semantics.
    h1 = jnp.maximum(x @ p["w1"] + p["b1"], 0.0)
    h2 = jnp.maximum(h1 @ p["w2"] + p["b2"], 0.0)
    return h2 @ p["w3"] + p["b3"]


if __name__ == "__main__":
    key = jax.random.PRNGKey(0)
    k_x, k_p = jax.random.split(key)

    batch, input_dim, output_dim = 8, 32, 16
    x = jax.random.normal(k_x, (batch, input_dim), dtype=jnp.float32)
    params = init_params(k_p, input_dim, output_dim)

    prepped = prepare_params(params)          # one-time weight prep (bf16 + pad)
    out = neural_network5(x, prepped)
    out = jax.block_until_ready(out)

    ref = reference(x, params)
    assert out.shape == (batch, output_dim)
    # bf16 MXU operands with f32 accumulation -> slightly looser tolerance
    # than a pure-f32 path.
    assert jnp.allclose(out, ref, atol=2e-2, rtol=2e-2)

    print("KERNEL_OK")
</pallas_src>

<mosaic_0001>
module attributes {stable_mosaic.version = 11 : i64} {
  func.func @mlp_kernel(%arg0: i32, %arg1: memref<8x32xbf16, #tpu.memory_space<vmem>>, %arg2: memref<32x512xbf16, #tpu.memory_space<vmem>>, %arg3: memref<1x512xf32, #tpu.memory_space<vmem>>, %arg4: memref<512x512xbf16, #tpu.memory_space<vmem>>, %arg5: memref<1x512xf32, #tpu.memory_space<vmem>>, %arg6: memref<512x128xbf16, #tpu.memory_space<vmem>>, %arg7: memref<1x128xf32, #tpu.memory_space<vmem>>, %arg8: memref<8x128xf32, #tpu.memory_space<vmem>>) attributes {dimension_semantics = [#tpu.dimension_semantics<parallel>], iteration_bounds = array<i64: 1>, scalar_prefetch = 0 : i64, scratch_operands = 0 : i64, tpu.core_type = #tpu.core_type<tc>, window_params = [{transform_indices = @transform_0, window_bounds = array<i64: 8, 32>}, {pipeline_mode = #tpu.pipeline_mode<synchronous>, transform_indices = @transform_1, window_bounds = array<i64: 32, 512>}, {pipeline_mode = #tpu.pipeline_mode<synchronous>, transform_indices = @transform_2, window_bounds = array<i64: 1, 512>}, {pipeline_mode = #tpu.pipeline_mode<synchronous>, transform_indices = @transform_3, window_bounds = array<i64: 512, 512>}, {pipeline_mode = #tpu.pipeline_mode<synchronous>, transform_indices = @transform_4, window_bounds = array<i64: 1, 512>}, {pipeline_mode = #tpu.pipeline_mode<synchronous>, transform_indices = @transform_5, window_bounds = array<i64: 512, 128>}, {pipeline_mode = #tpu.pipeline_mode<synchronous>, transform_indices = @transform_6, window_bounds = array<i64: 1, 128>}, {transform_indices = @transform_7, window_bounds = array<i64: 8, 128>}]} {
    %c0 = arith.constant 0 : index
    %c0_0 = arith.constant 0 : index
    %0 = vector.load %arg1[%c0, %c0_0] : memref<8x32xbf16, #tpu.memory_space<vmem>>, vector<8x32xbf16>
    %c0_1 = arith.constant 0 : index
    %c0_2 = arith.constant 0 : index
    %1 = vector.load %arg2[%c0_1, %c0_2] : memref<32x512xbf16, #tpu.memory_space<vmem>>, vector<32x512xbf16>
    %cst = arith.constant dense<0.000000e+00> : vector<8x512xf32>
    %2 = tpu.matmul %0, %1, %cst {dimension_numbers = #tpu.dot_dimension_numbers<[1], [0], [0], [1], [0, 0, 1, 1], [], []>} : vector<8x32xbf16>, vector<32x512xbf16>, vector<8x512xf32> -> vector<8x512xf32>
    %c0_3 = arith.constant 0 : index
    %c0_4 = arith.constant 0 : index
    %3 = vector.load %arg3[%c0_3, %c0_4] : memref<1x512xf32, #tpu.memory_space<vmem>>, vector<1x512xf32>
    %4 = vector.broadcast %3 : vector<1x512xf32> to vector<8x512xf32>
    %5 = arith.addf %2, %4 : vector<8x512xf32>
    %cst_5 = arith.constant 0.000000e+00 : f32
    %6 = vector.broadcast %cst_5 : f32 to vector<8x512xf32>
    %7 = arith.maximumf %5, %6 : vector<8x512xf32>
    %8 = arith.truncf %7 : vector<8x512xf32> to vector<8x512xbf16>
    %c0_6 = arith.constant 0 : index
    %c0_7 = arith.constant 0 : index
    %9 = vector.load %arg4[%c0_6, %c0_7] : memref<512x512xbf16, #tpu.memory_space<vmem>>, vector<512x512xbf16>
    %cst_8 = arith.constant dense<0.000000e+00> : vector<8x512xf32>
    %10 = tpu.matmul %8, %9, %cst_8 {dimension_numbers = #tpu.dot_dimension_numbers<[1], [0], [0], [1], [0, 0, 1, 1], [], []>} : vector<8x512xbf16>, vector<512x512xbf16>, vector<8x512xf32> -> vector<8x512xf32>
    %c0_9 = arith.constant 0 : index
    %c0_10 = arith.constant 0 : index
    %11 = vector.load %arg5[%c0_9, %c0_10] : memref<1x512xf32, #tpu.memory_space<vmem>>, vector<1x512xf32>
    %12 = vector.broadcast %11 : vector<1x512xf32> to vector<8x512xf32>
    %13 = arith.addf %10, %12 : vector<8x512xf32>
    %cst_11 = arith.constant 0.000000e+00 : f32
    %14 = vector.broadcast %cst_11 : f32 to vector<8x512xf32>
    %15 = arith.maximumf %13, %14 : vector<8x512xf32>
    %16 = arith.truncf %15 : vector<8x512xf32> to vector<8x512xbf16>
    %c0_12 = arith.constant 0 : index
    %c0_13 = arith.constant 0 : index
    %17 = vector.load %arg6[%c0_12, %c0_13] : memref<512x128xbf16, #tpu.memory_space<vmem>>, vector<512x128xbf16>
    %cst_14 = arith.constant dense<0.000000e+00> : vector<8x128xf32>
    %18 = tpu.matmul %16, %17, %cst_14 {dimension_numbers = #tpu.dot_dimension_numbers<[1], [0], [0], [1], [0, 0, 1, 1], [], []>} : vector<8x512xbf16>, vector<512x128xbf16>, vector<8x128xf32> -> vector<8x128xf32>
    %c0_15 = arith.constant 0 : index
    %c0_16 = arith.constant 0 : index
    %19 = vector.load %arg7[%c0_15, %c0_16] : memref<1x128xf32, #tpu.memory_space<vmem>>, vector<1x128xf32>
    %20 = vector.broadcast %19 : vector<1x128xf32> to vector<8x128xf32>
    %21 = arith.addf %18, %20 : vector<8x128xf32>
    %c0_17 = arith.constant 0 : index
    %c0_18 = arith.constant 0 : index
    %22 = vector.load %arg8[%c0_17, %c0_18] : memref<8x128xf32, #tpu.memory_space<vmem>>, vector<8x128xf32>
    tpu.vector_store %arg8[%c0_17, %c0_18], %21 {strides = array<i32>} : memref<8x128xf32, #tpu.memory_space<vmem>>, vector<8x128xf32>,
    return
  }
  func.func @transform_0(%arg0: i32) -> (i32, i32) {
    %c0_i32 = arith.constant 0 : i32
    %c0_i32_0 = arith.constant 0 : i32
    return %arg0, %c0_i32 : i32, i32
  }
  func.func @transform_1(%arg0: i32) -> (i32, i32) {
    %c0_i32 = arith.constant 0 : i32
    %c0_i32_0 = arith.constant 0 : i32
    %c0_i32_1 = arith.constant 0 : i32
    return %c0_i32, %c0_i32_0 : i32, i32
  }
  func.func @transform_2(%arg0: i32) -> (i32, i32) {
    %c0_i32 = arith.constant 0 : i32
    %c0_i32_0 = arith.constant 0 : i32
    %c0_i32_1 = arith.constant 0 : i32
    return %c0_i32, %c0_i32_0 : i32, i32
  }
  func.func @transform_3(%arg0: i32) -> (i32, i32) {
    %c0_i32 = arith.constant 0 : i32
    %c0_i32_0 = arith.constant 0 : i32
    %c0_i32_1 = arith.constant 0 : i32
    return %c0_i32, %c0_i32_0 : i32, i32
  }
  func.func @transform_4(%arg0: i32) -> (i32, i32) {
    %c0_i32 = arith.constant 0 : i32
    %c0_i32_0 = arith.constant 0 : i32
    %c0_i32_1 = arith.constant 0 : i32
    return %c0_i32, %c0_i32_0 : i32, i32
  }
  func.func @transform_5(%arg0: i32) -> (i32, i32) {
    %c0_i32 = arith.constant 0 : i32
    %c0_i32_0 = arith.constant 0 : i32
    %c0_i32_1 = arith.constant 0 : i32
    return %c0_i32, %c0_i32_0 : i32, i32
  }
  func.func @transform_6(%arg0: i32) -> (i32, i32) {
    %c0_i32 = arith.constant 0 : i32
    %c0_i32_0 = arith.constant 0 : i32
    %c0_i32_1 = arith.constant 0 : i32
    return %c0_i32, %c0_i32_0 : i32, i32
  }
  func.func @transform_7(%arg0: i32) -> (i32, i32) {
    %c0_i32 = arith.constant 0 : i32
    %c0_i32_0 = arith.constant 0 : i32
    return %arg0, %c0_i32 : i32, i32
  }
}

</mosaic_0001>

<llo_original>
// kernel: tpu_custom_call.1
$region0: #{tpu_custom_call.1}
  #allocation0 [shape = 'u32[]', space=smem, size = 0x4, offset = 0x4, fixed_abs, tag = 'smem constant byte address 0x4 - core index']
  #allocation1 [shape = 'u32[144,128]{1,0:T(1,128)}', space=vmem, size = 0x12000, scoped, tag = 'internal scratch']
  %s0 = inlined_call_operand.hbm [shape: bf16[8,32], index: 0, kind: input, shape index: {}]
  %s1 = inlined_call_operand.hbm [shape: bf16[32,512], index: 1, kind: input, shape index: {}]
  %s2 = inlined_call_operand.vmem [shape: f32[1,512], index: 2, kind: input, shape index: {}]
  %s3 = inlined_call_operand.hbm [shape: bf16[512,512], index: 3, kind: input, shape index: {}]
  %s4 = inlined_call_operand.vmem [shape: f32[1,512], index: 4, kind: input, shape index: {}]
  %s5 = inlined_call_operand.hbm [shape: bf16[512,128], index: 5, kind: input, shape index: {}]
  %s6 = inlined_call_operand.vmem [shape: f32[1,128], index: 6, kind: input, shape index: {}]
  %s7 = inlined_call_operand.hbm [shape: f32[8,128], index: 7, kind: output, shape index: {}]
  %s8 = sld [smem:[#allocation0]]
  $region54: #{tpu_custom_call.1} parent=0
    _
  %s10 = ssub.s32 1, %s8
  %s11 = scalar_select 0, %s10, %s8
  $region1: #{tpu_custom_call.1} parent=0
    #allocation2 [shape = 'u8[2048]{0}', space=vmem, size = 0x800, scoped, tag = 'input window, operand 0, single buffered']
    #allocation3 [shape = 's32[1]{0}', space=sflag, size = 0x4, scoped, tag = 'scoped memory for tpu_custom_call.1']
    #allocation4 [shape = 's32[1]{0}', space=sflag, size = 0x4, scoped, tag = 'scoped memory for tpu_custom_call.1']
    #allocation5 [shape = 'u8[32768]{0}', space=vmem, size = 0x8000, scoped, tag = 'input window, operand 1, single buffered']
    #allocation6 [shape = 's32[1]{0}', space=sflag, size = 0x4, scoped, tag = 'scoped memory for tpu_custom_call.1']
    #allocation7 [shape = 'u8[524288]{0}', space=vmem, size = 0x80000, scoped, tag = 'input window, operand 3, single buffered']
    #allocation8 [shape = 'u8[131072]{0}', space=vmem, size = 0x20000, scoped, tag = 'input window, operand 5, single buffered']
    #allocation9 [shape = 's32[1]{0}', space=sflag, size = 0x4, scoped, tag = 'scoped memory for tpu_custom_call.1']
    #allocation10 [shape = 'u8[4096]{0}', space=vmem, size = 0x1000, scoped, tag = 'output window, operand 0, single buffered']
    %12 = vsyncpa [#allocation3], 0
    %13 = vsyncpa [#allocation6], 0
    %14 = vsyncpa [#allocation9], 0
    %15 = vsyncpa [#allocation4], 0
    // Predicated region
    $region2: #{tpu_custom_call.1} parent=1 // pred_check
      _
    $region3: #{tpu_custom_call.1} parent=1 // pred_check_branch
      %17 = sbr.rel (0) target = $region5
    $region4: #{tpu_custom_call.1} parent=1 // pred_region
      %s19 = ssub.s32 64, 64
      %20 = vsyncadd [#allocation3], %s19
      %s22 = sshll.u32 [#allocation2], 4
      %s23 = int_to_ptr.vmem [resolvable:$true] %s22
      %25 = dma.hbm_to_vmem [thread:$0]  %s0, 64, %s23, [#allocation3]
    $region5: #{tpu_custom_call.1} parent=1 // pred_fallthru
      _
    // Predicated region
    $region6: #{tpu_custom_call.1} parent=1 // pred_check
      _
    $region7: #{tpu_custom_call.1} parent=1 // pred_check_branch
      %27 = sbr.rel (0) target = $region9
    $region8: #{tpu_custom_call.1} parent=1 // pred_region
      %s29 = ssub.s32 1024, 1024
      %30 = vsyncadd [#allocation6], %s29
      %s31 = sshll.u32 [#allocation5], 4
      %s32 = int_to_ptr.vmem [resolvable:$true] %s31
      %37 = dma.hbm_to_vmem [thread:$0]  %s1, 1024, %s32, [#allocation6], 256, 256, 16
    $region9: #{tpu_custom_call.1} parent=1 // pred_fallthru
      _
    // Predicated region
    $region10: #{tpu_custom_call.1} parent=1 // pred_check
      _
    $region11: #{tpu_custom_call.1} parent=1 // pred_check_branch
      %39 = sbr.rel (0) target = $region13
    $region12: #{tpu_custom_call.1} parent=1 // pred_region
      _
    $region13: #{tpu_custom_call.1} parent=1 // pred_fallthru
      _
    // Predicated region
    $region14: #{tpu_custom_call.1} parent=1 // pred_check
      _
    $region15: #{tpu_custom_call.1} parent=1 // pred_check_branch
      %41 = sbr.rel (0) target = $region17
    $region16: #{tpu_custom_call.1} parent=1 // pred_region
      %s43 = ssub.s32 16384, 16384
      %44 = vsyncadd [#allocation6], %s43
      %s45 = sshll.u32 [#allocation7], 4
      %s46 = int_to_ptr.vmem [resolvable:$true] %s45
      %51 = dma.hbm_to_vmem [thread:$0]  %s3, 16384, %s46, [#allocation6], 256, 256, 16
    $region17: #{tpu_custom_call.1} parent=1 // pred_fallthru
      _
    // Predicated region
    $region18: #{tpu_custom_call.1} parent=1 // pred_check
      _
    $region19: #{tpu_custom_call.1} parent=1 // pred_check_branch
      %53 = sbr.rel (0) target = $region21
    $region20: #{tpu_custom_call.1} parent=1 // pred_region
      _
    $region21: #{tpu_custom_call.1} parent=1 // pred_fallthru
      _
    // Predicated region
    $region22: #{tpu_custom_call.1} parent=1 // pred_check
      _
    $region23: #{tpu_custom_call.1} parent=1 // pred_check_branch
      %55 = sbr.rel (0) target = $region25
    $region24: #{tpu_custom_call.1} parent=1 // pred_region
      %s57 = ssub.s32 4096, 4096
      %58 = vsyncadd [#allocation9], %s57
      %s59 = sshll.u32 [#allocation8], 4
      %s60 = int_to_ptr.vmem [resolvable:$true] %s59
      %65 = dma.hbm_to_vmem [thread:$0]  %s5, 4096, %s60, [#allocation9], 64, 64, 4
    $region25: #{tpu_custom_call.1} parent=1 // pred_fallthru
      _
    // Predicated region
    $region26: #{tpu_custom_call.1} parent=1 // pred_check
      _
    $region27: #{tpu_custom_call.1} parent=1 // pred_check_branch
      %67 = sbr.rel (0) target = $region29
    $region28: #{tpu_custom_call.1} parent=1 // pred_region
      _
    $region29: #{tpu_custom_call.1} parent=1 // pred_fallthru
      _
    // Predicated region
    $region30: #{tpu_custom_call.1} parent=1 // pred_check
      _
    $region31: #{tpu_custom_call.1} parent=1 // pred_check_branch
      %69 = sbr.rel (0) target = $region33
    $region32: #{tpu_custom_call.1} parent=1 // pred_region
      %70 = dma.done [#allocation3], 64
    $region33: #{tpu_custom_call.1} parent=1 // pred_fallthru
      _
    // Predicated region
    $region34: #{tpu_custom_call.1} parent=1 // pred_check
      _
    $region35: #{tpu_custom_call.1} parent=1 // pred_check_branch
      %72 = sbr.rel (0) target = $region37
    $region36: #{tpu_custom_call.1} parent=1 // pred_region
      %73 = dma.done [#allocation6], 1024
    $region37: #{tpu_custom_call.1} parent=1 // pred_fallthru
      _
    // Predicated region
    $region38: #{tpu_custom_call.1} parent=1 // pred_check
      _
    $region39: #{tpu_custom_call.1} parent=1 // pred_check_branch
      %75 = sbr.rel (0) target = $region41
    $region40: #{tpu_custom_call.1} parent=1 // pred_region
      %76 = dma.done [#allocation6], 16384
    $region41: #{tpu_custom_call.1} parent=1 // pred_fallthru
      _
    // Predicated region
    $region42: #{tpu_custom_call.1} parent=1 // pred_check
      _
    $region43: #{tpu_custom_call.1} parent=1 // pred_check_branch
      %78 = sbr.rel (0) target = $region45
    $region44: #{tpu_custom_call.1} parent=1 // pred_region
      %79 = dma.done [#allocation9], 4096
    $region45: #{tpu_custom_call.1} parent=1 // pred_fallthru
      _
    %v81 = vld [vmem:[#allocation2] sm:$0xf]
    %v82 = vld [vmem:[#allocation5] sm:$0xff]
    %v83 = vld [vmem:[#allocation5 + $0x8] sm:$0xff]
    %v84 = vld [vmem:[#allocation5 + $0x10] sm:$0xff]
    %v85 = vld [vmem:[#allocation5 + $0x18] sm:$0xff]
    %v86 = vld [vmem:[#allocation5 + $0x20] sm:$0xff]
    %v87 = vld [vmem:[#allocation5 + $0x28] sm:$0xff]
    %v88 = vld [vmem:[#allocation5 + $0x30] sm:$0xff]
    %v89 = vld [vmem:[#allocation5 + $0x38] sm:$0xff]
    %v90 = vld [vmem:[%s2] sm:$0xf]
    %v92 = vlaneseq
    %v93 = vshrl.u32 %v92, 7
    %v94 = vsub.s32 0, %v93
    %v95 = vrot.slane %v90, %v94
    %v96 = vlaneseq
    %v97 = vshrl.u32 %v96, 7
    %v98 = vsub.s32 1, %v97
    %v99 = vrot.slane %v90, %v98
    %v100 = vlaneseq
    %v101 = vshrl.u32 %v100, 7
    %v102 = vsub.s32 2, %v101
    %v103 = vrot.slane %v90, %v102
    %v104 = vlaneseq
    %v105 = vshrl.u32 %v104, 7
    %v106 = vsub.s32 3, %v105
    %v107 = vrot.slane %v90, %v106
    %v120 = vunpack.c.l.b16 %v82
    %v121 = vunpack.c.h.b16 %v82
    %v122 = vunpack.c.l.b16 %v83
    %v123 = vunpack.c.h.b16 %v83
    %v124 = vunpack.c.l.b16 %v84
    %v125 = vunpack.c.h.b16 %v84
    %v126 = vunpack.c.l.b16 %v85
    %v127 = vunpack.c.h.b16 %v85
    %v128 = vunpack.c.l.b16 %v86
    %v129 = vunpack.c.h.b16 %v86
    %v130 = vunpack.c.l.b16 %v87
    %v131 = vunpack.c.h.b16 %v87
    %v132 = vunpack.c.l.b16 %v88
    %v133 = vunpack.c.h.b16 %v88
    %v134 = vunpack.c.l.b16 %v89
    %v135 = vunpack.c.h.b16 %v89
    %v136 = vpack.c.b16 %v124, %v120
    %v137 = vpack.c.b16 %v125, %v121
    %v138 = vpack.c.b16 %v126, %v122
    %v139 = vpack.c.b16 %v127, %v123
    %v140 = vpack.c.b16 %v132, %v128
    %v141 = vpack.c.b16 %v133, %v129
    %v142 = vpack.c.b16 %v134, %v130
    %v143 = vpack.c.b16 %v135, %v131
    %vm152 = vcmask 261120
    %v154 = vsel %vm152, %v81, 0
    %156 = vmatprep.subr.bf16.mxu0 %v137
    %157 = vmatpush1.bf16.msra.mxu0 %v136
    %158 = vmatprep.subr.bf16.mxu0 %v141
    %159 = vmatpush1.bf16.msra.mxu0 %v140
    %160 = vmatprep.subr.bf16.mxu0 0
    %161 = vmatpush1.bf16.msra.mxu0 0
    %162 = vmatprep.subr.bf16.mxu0 0
    %163 = vmatpush1.bf16.msra.mxu0 0
    %164 = vmatprep.subr.bf16.mxu0 0
    %165 = vmatpush1.bf16.msra.mxu0 0
    %166 = vmatprep.subr.bf16.mxu0 0
    %167 = vmatpush1.bf16.msra.mxu0 0
    %168 = vmatprep.subr.bf16.mxu0 0
    %169 = vmatpush1.bf16.msra.mxu0 0
    %170 = vmatprep.subr.bf16.mxu0 0
    %171 = vmatpush1.bf16.msra.mxu0 0
    %172 = vmatprep.subr.bf16.mxu0 0
    %173 = vmatpush1.bf16.msra.mxu0 0
    %174 = vmatprep.subr.bf16.mxu0 0
    %175 = vmatpush1.bf16.msra.mxu0 0
    %176 = vmatprep.subr.bf16.mxu0 0
    %177 = vmatpush1.bf16.msra.mxu0 0
    %178 = vmatprep.subr.bf16.mxu0 0
    %179 = vmatpush1.bf16.msra.mxu0 0
    %180 = vmatprep.subr.bf16.mxu0 0
    %181 = vmatpush1.bf16.msra.mxu0 0
    %182 = vmatprep.subr.bf16.mxu0 0
    %183 = vmatpush1.bf16.msra.mxu0 0
    %184 = vmatprep.subr.bf16.mxu0 0
    %185 = vmatpush1.bf16.msra.mxu0 0
    %186 = vmatprep.subr.bf16.mxu0 0
    %187 = vmatpush1.bf16.msra.mxu0 0
    %188 = vmatprep.mubr.bf16.mxu0 0
    %189 = vmatmul.mubr.bf16.gmra.mrb[0].mxu0 %v154
    %v190 = vpop.f32.mrb[0].mxu0
    %v191 = vadd.f32 %v95, %v190
    %v192 = vpop.f32.mrb[0].mxu0
    %v193 = vadd.f32 %v99, %v192
    %v194 = vpop.f32.mrb[0].mxu0
    %v195 = vpop.f32.mrb[0].mxu0
    %196 = vdwg.mxu0
    %197 = vmatprep.subr.bf16.mxu0 %v139
    %198 = vmatpush1.bf16.msra.mxu0 %v138
    %199 = vmatprep.subr.bf16.mxu0 %v143
    %200 = vmatpush1.bf16.msra.mxu0 %v142
    %201 = vmatprep.subr.bf16.mxu0 0
    %202 = vmatpush1.bf16.msra.mxu0 0
    %203 = vmatprep.subr.bf16.mxu0 0
    %204 = vmatpush1.bf16.msra.mxu0 0
    %205 = vmatprep.subr.bf16.mxu0 0
    %206 = vmatpush1.bf16.msra.mxu0 0
    %207 = vmatprep.subr.bf16.mxu0 0
    %208 = vmatpush1.bf16.msra.mxu0 0
    %209 = vmatprep.subr.bf16.mxu0 0
    %210 = vmatpush1.bf16.msra.mxu0 0
    %211 = vmatprep.subr.bf16.mxu0 0
    %212 = vmatpush1.bf16.msra.mxu0 0
    %213 = vmatprep.subr.bf16.mxu0 0
    %214 = vmatpush1.bf16.msra.mxu0 0
    %215 = vmatprep.subr.bf16.mxu0 0
    %216 = vmatpush1.bf16.msra.mxu0 0
    %217 = vmatprep.subr.bf16.mxu0 0
    %218 = vmatpush1.bf16.msra.mxu0 0
    %219 = vmatprep.subr.bf16.mxu0 0
    %220 = vmatpush1.bf16.msra.mxu0 0
    %221 = vmatprep.subr.bf16.mxu0 0
    %222 = vmatpush1.bf16.msra.mxu0 0
    %223 = vmatprep.subr.bf16.mxu0 0
    %224 = vmatpush1.bf16.msra.mxu0 0
    %225 = vmatprep.subr.bf16.mxu0 0
    %226 = vmatpush1.bf16.msra.mxu0 0
    %227 = vmatprep.subr.bf16.mxu0 0
    %228 = vmatpush1.bf16.msra.mxu0 0
    %229 = vmatprep.mubr.bf16.mxu0 0
    %230 = vmatmul.mubr.bf16.gmra.mrb[0].mxu0 %v154
    %v231 = vpop.f32.mrb[0].mxu0
    %v232 = vadd.f32 %v103, %v231
    %v233 = vpop.f32.mrb[0].mxu0
    %v234 = vadd.f32 %v107, %v233
    %v235 = vpop.f32.mrb[0].mxu0
    %v236 = vpop.f32.mrb[0].mxu0
    %237 = vdwg.mxu0
    %v238 = vmax.f32 %v191, 0.0
    %v239 = vmax.f32 %v193, 0.0
    %v240 = vmax.f32 %v232, 0.0
    %v241 = vmax.f32 %v234, 0.0
    %v242 = vpack.c.bf16 %v238, %v238
    %v243 = vpack.c.bf16 %v239, %v239
    %v244 = vpack.c.bf16 %v240, %v240
    %v245 = vpack.c.bf16 %v241, %v241
    %v246 = vld [vmem:[#allocation7] sm:$0xff]
    %v247 = vld [vmem:[#allocation7 + $0x8] sm:$0xff]
    %v248 = vld [vmem:[#allocation7 + $0x10] sm:$0xff]
    %v249 = vld [vmem:[#allocation7 + $0x18] sm:$0xff]
    %v250 = vld [vmem:[#allocation7 + $0x20] sm:$0xff]
    %v251 = vld [vmem:[#allocation7 + $0x28] sm:$0xff]
    %v252 = vld [vmem:[#allocation7 + $0x30] sm:$0xff]
    %v253 = vld [vmem:[#allocation7 + $0x38] sm:$0xff]
    %v254 = vld [vmem:[#allocation7 + $0x40] sm:$0xff]
    %v255 = vld [vmem:[#allocation7 + $0x48] sm:$0xff]
    %v256 = vld [vmem:[#allocation7 + $0x50] sm:$0xff]
    %v257 = vld [vmem:[#allocation7 + $0x58] sm:$0xff]
    %v258 = vld [vmem:[#allocation7 + $0x60] sm:$0xff]
    %v259 = vld [vmem:[#allocation7 + $0x68] sm:$0xff]
    %v260 = vld [vmem:[#allocation7 + $0x70] sm:$0xff]
    %v261 = vld [vmem:[#allocation7 + $0x78] sm:$0xff]
    %v262 = vld [vmem:[#allocation7 + $0x80] sm:$0xff]
    %v263 = vld [vmem:[#allocation7 + $0x88] sm:$0xff]
    %v264 = vld [vmem:[#allocation7 + $0x90] sm:$0xff]
    %v265 = vld [vmem:[#allocation7 + $0x98] sm:$0xff]
    %v266 = vld [vmem:[#allocation7 + $0xa0] sm:$0xff]
    %v267 = vld [vmem:[#allocation7 + $0xa8] sm:$0xff]
    %v268 = vld [vmem:[#allocation7 + $0xb0] sm:$0xff]
    %v269 = vld [vmem:[#allocation7 + $0xb8] sm:$0xff]
    %v270 = vld [vmem:[#allocation7 + $0xc0] sm:$0xff]
    %v271 = vld [vmem:[#allocation7 + $0xc8] sm:$0xff]
    %v272 = vld [vmem:[#allocation7 + $0xd0] sm:$0xff]
    %v273 = vld [vmem:[#allocation7 + $0xd8] sm:$0xff]
    %v274 = vld [vmem:[#allocation7 + $0xe0] sm:$0xff]
    %v275 = vld [vmem:[#allocation7 + $0xe8] sm:$0xff]
    %v276 = vld [vmem:[#allocation7 + $0xf0] sm:$0xff]
    %v277 = vld [vmem:[#allocation7 + $0xf8] sm:$0xff]
    %v278 = vld [vmem:[#allocation7 + $0x100] sm:$0xff]
    %v279 = vld [vmem:[#allocation7 + $0x108] sm:$0xff]
    %v280 = vld [vmem:[#allocation7 + $0x110] sm:$0xff]
    %v281 = vld [vmem:[#allocation7 + $0x118] sm:$0xff]
    %v282 = vld [vmem:[#allocation7 + $0x120] sm:$0xff]
    %v283 = vld [vmem:[#allocation7 + $0x128] sm:$0xff]
    %v284 = vld [vmem:[#allocation7 + $0x130] sm:$0xff]
    %v285 = vld [vmem:[#allocation7 + $0x138] sm:$0xff]
    %v286 = vld [vmem:[#allocation7 + $0x140] sm:$0xff]
    %v287 = vld [vmem:[#allocation7 + $0x148] sm:$0xff]
    %v288 = vld [vmem:[#allocation7 + $0x150] sm:$0xff]
    %v289 = vld [vmem:[#allocation7 + $0x158] sm:$0xff]
    %v290 = vld [vmem:[#allocation7 + $0x160] sm:$0xff]
    %v291 = vld [vmem:[#allocation7 + $0x168] sm:$0xff]
    %v292 = vld [vmem:[#allocation7 + $0x170] sm:$0xff]
    %v293 = vld [vmem:[#allocation7 + $0x178] sm:$0xff]
    %v294 = vld [vmem:[#allocation7 + $0x180] sm:$0xff]
    %v295 = vld [vmem:[#allocation7 + $0x188] sm:$0xff]
    %v296 = vld [vmem:[#allocation7 + $0x190] sm:$0xff]
    %v297 = vld [vmem:[#allocation7 + $0x198] sm:$0xff]
    %v298 = vld [vmem:[#allocation7 + $0x1a0] sm:$0xff]
    %v299 = vld [vmem:[#allocation7 + $0x1a8] sm:$0xff]
    %v300 = vld [vmem:[#allocation7 + $0x1b0] sm:$0xff]
    %v301 = vld [vmem:[#allocation7 + $0x1b8] sm:$0xff]
    %v302 = vld [vmem:[#allocation7 + $0x1c0] sm:$0xff]
    %v303 = vld [vmem:[#allocation7 + $0x1c8] sm:$0xff]
    %v304 = vld [vmem:[#allocation7 + $0x1d0] sm:$0xff]
    %v305 = vld [vmem:[#allocation7 + $0x1d8] sm:$0xff]
    %v306 = vld [vmem:[#allocation7 + $0x1e0] sm:$0xff]
    %v307 = vld [vmem:[#allocation7 + $0x1e8] sm:$0xff]
    %v308 = vld [vmem:[#allocation7 + $0x1f0] sm:$0xff]
    %v309 = vld [vmem:[#allocation7 + $0x1f8] sm:$0xff]
    %v310 = vld [vmem:[#allocation7 + $0x200] sm:$0xff]
    %v311 = vld [vmem:[#allocation7 + $0x208] sm:$0xff]
    %v312 = vld [vmem:[#allocation7 + $0x210] sm:$0xff]
    %v313 = vld [vmem:[#allocation7 + $0x218] sm:$0xff]
    %v314 = vld [vmem:[#allocation7 + $0x220] sm:$0xff]
    %v315 = vld [vmem:[#allocation7 + $0x228] sm:$0xff]
    %v316 = vld [vmem:[#allocation7 + $0x230] sm:$0xff]
    %v317 = vld [vmem:[#allocation7 + $0x238] sm:$0xff]
    %v318 = vld [vmem:[#allocation7 + $0x240] sm:$0xff]
    %v319 = vld [vmem:[#allocation7 + $0x248] sm:$0xff]
    %v320 = vld [vmem:[#allocation7 + $0x250] sm:$0xff]
    %v321 = vld [vmem:[#allocation7 + $0x258] sm:$0xff]
    %v322 = vld [vmem:[#allocation7 + $0x260] sm:$0xff]
    %v323 = vld [vmem:[#allocation7 + $0x268] sm:$0xff]
    %v324 = vld [vmem:[#allocation7 + $0x270] sm:$0xff]
    %v325 = vld [vmem:[#allocation7 + $0x278] sm:$0xff]
    %v326 = vld [vmem:[#allocation7 + $0x280] sm:$0xff]
    %v327 = vld [vmem:[#allocation7 + $0x288] sm:$0xff]
    %v328 = vld [vmem:[#allocation7 + $0x290] sm:$0xff]
    %v329 = vld [vmem:[#allocation7 + $0x298] sm:$0xff]
    %v330 = vld [vmem:[#allocation7 + $0x2a0] sm:$0xff]
    %v331 = vld [vmem:[#allocation7 + $0x2a8] sm:$0xff]
    %v332 = vld [vmem:[#allocation7 + $0x2b0] sm:$0xff]
    %v333 = vld [vmem:[#allocation7 + $0x2b8] sm:$0xff]
    %v334 = vld [vmem:[#allocation7 + $0x2c0] sm:$0xff]
    %v335 = vld [vmem:[#allocation7 + $0x2c8] sm:$0xff]
    %v336 = vld [vmem:[#allocation7 + $0x2d0] sm:$0xff]
    %v337 = vld [vmem:[#allocation7 + $0x2d8] sm:$0xff]
    %v338 = vld [vmem:[#allocation7 + $0x2e0] sm:$0xff]
    %v339 = vld [vmem:[#allocation7 + $0x2e8] sm:$0xff]
    %v340 = vld [vmem:[#allocation7 + $0x2f0] sm:$0xff]
    %v341 = vld [vmem:[#allocation7 + $0x2f8] sm:$0xff]
    %v342 = vld [vmem:[#allocation7 + $0x300] sm:$0xff]
    %v343 = vld [vmem:[#allocation7 + $0x308] sm:$0xff]
    %v344 = vld [vmem:[#allocation7 + $0x310] sm:$0xff]
    %v345 = vld [vmem:[#allocation7 + $0x318] sm:$0xff]
    %v346 = vld [vmem:[#allocation7 + $0x320] sm:$0xff]
    %v347 = vld [vmem:[#allocation7 + $0x328] sm:$0xff]
    %v348 = vld [vmem:[#allocation7 + $0x330] sm:$0xff]
    %v349 = vld [vmem:[#allocation7 + $0x338] sm:$0xff]
    %v350 = vld [vmem:[#allocation7 + $0x340] sm:$0xff]
    %v351 = vld [vmem:[#allocation7 + $0x348] sm:$0xff]
    %v352 = vld [vmem:[#allocation7 + $0x350] sm:$0xff]
    %v353 = vld [vmem:[#allocation7 + $0x358] sm:$0xff]
    %v354 = vld [vmem:[#allocation7 + $0x360] sm:$0xff]
    %v355 = vld [vmem:[#allocation7 + $0x368] sm:$0xff]
    %v356 = vld [vmem:[#allocation7 + $0x370] sm:$0xff]
    %v357 = vld [vmem:[#allocation7 + $0x378] sm:$0xff]
    %v358 = vld [vmem:[#allocation7 + $0x380] sm:$0xff]
    %v359 = vld [vmem:[#allocation7 + $0x388] sm:$0xff]
    %v360 = vld [vmem:[#allocation7 + $0x390] sm:$0xff]
    %v361 = vld [vmem:[#allocation7 + $0x398] sm:$0xff]
    %v362 = vld [vmem:[#allocation7 + $0x3a0] sm:$0xff]
    %v363 = vld [vmem:[#allocation7 + $0x3a8] sm:$0xff]
    %v364 = vld [vmem:[#allocation7 + $0x3b0] sm:$0xff]
    %v365 = vld [vmem:[#allocation7 + $0x3b8] sm:$0xff]
    %v366 = vld [vmem:[#allocation7 + $0x3c0] sm:$0xff]
    %v367 = vld [vmem:[#allocation7 + $0x3c8] sm:$0xff]
    %v368 = vld [vmem:[#allocation7 + $0x3d0] sm:$0xff]
    %v369 = vld [vmem:[#allocation7 + $0x3d8] sm:$0xff]
    %v370 = vld [vmem:[#allocation7 + $0x3e0] sm:$0xff]
    %v371 = vld [vmem:[#allocation7 + $0x3e8] sm:$0xff]
    %v372 = vld [vmem:[#allocation7 + $0x3f0] sm:$0xff]
    %v373 = vld [vmem:[#allocation7 + $0x3f8] sm:$0xff]
    %v374 = vld [vmem:[%s4] sm:$0xf]
    %v376 = vlaneseq
    %v377 = vshrl.u32 %v376, 7
    %v378 = vsub.s32 0, %v377
    %v379 = vrot.slane %v374, %v378
    %v380 = vlaneseq
    %v381 = vshrl.u32 %v380, 7
    %v382 = vsub.s32 1, %v381
    %v383 = vrot.slane %v374, %v382
    %v384 = vlaneseq
    %v385 = vshrl.u32 %v384, 7
    %v386 = vsub.s32 2, %v385
    %v387 = vrot.slane %v374, %v386
    %v388 = vlaneseq
    %v389 = vshrl.u32 %v388, 7
    %v390 = vsub.s32 3, %v389
    %v391 = vrot.slane %v374, %v390
    %v524 = vunpack.c.l.b16 %v246
    %v525 = vunpack.c.h.b16 %v246
    %v526 = vunpack.c.l.b16 %v247
    %v527 = vunpack.c.h.b16 %v247
    %v528 = vunpack.c.l.b16 %v248
    %v529 = vunpack.c.h.b16 %v248
    %v530 = vunpack.c.l.b16 %v249
    %v531 = vunpack.c.h.b16 %v249
    %v532 = vunpack.c.l.b16 %v250
    %v533 = vunpack.c.h.b16 %v250
    %v534 = vunpack.c.l.b16 %v251
    %v535 = vunpack.c.h.b16 %v251
    %v536 = vunpack.c.l.b16 %v252
    %v537 = vunpack.c.h.b16 %v252
    %v538 = vunpack.c.l.b16 %v253
    %v539 = vunpack.c.h.b16 %v253
    %v540 = vunpack.c.l.b16 %v254
    %v541 = vunpack.c.h.b16 %v254
    %v542 = vunpack.c.l.b16 %v255
    %v543 = vunpack.c.h.b16 %v255
    %v544 = vunpack.c.l.b16 %v256
    %v545 = vunpack.c.h.b16 %v256
    %v546 = vunpack.c.l.b16 %v257
    %v547 = vunpack.c.h.b16 %v257
    %v548 = vunpack.c.l.b16 %v258
    %v549 = vunpack.c.h.b16 %v258
    %v550 = vunpack.c.l.b16 %v259
    %v551 = vunpack.c.h.b16 %v259
    %v552 = vunpack.c.l.b16 %v260
    %v553 = vunpack.c.h.b16 %v260
    %v554 = vunpack.c.l.b16 %v261
    %v555 = vunpack.c.h.b16 %v261
    %v556 = vunpack.c.l.b16 %v262
    %v557 = vunpack.c.h.b16 %v262
    %v558 = vunpack.c.l.b16 %v263
    %v559 = vunpack.c.h.b16 %v263
    %v560 = vunpack.c.l.b16 %v264
    %v561 = vunpack.c.h.b16 %v264
    %v562 = vunpack.c.l.b16 %v265
    %v563 = vunpack.c.h.b16 %v265
    %v564 = vunpack.c.l.b16 %v266
    %v565 = vunpack.c.h.b16 %v266
    %v566 = vunpack.c.l.b16 %v267
    %v567 = vunpack.c.h.b16 %v267
    %v568 = vunpack.c.l.b16 %v268
    %v569 = vunpack.c.h.b16 %v268
    %v570 = vunpack.c.l.b16 %v269
    %v571 = vunpack.c.h.b16 %v269
    %v572 = vunpack.c.l.b16 %v270
    %v573 = vunpack.c.h.b16 %v270
    %v574 = vunpack.c.l.b16 %v271
    %v575 = vunpack.c.h.b16 %v271
    %v576 = vunpack.c.l.b16 %v272
    %v577 = vunpack.c.h.b16 %v272
    %v578 = vunpack.c.l.b16 %v273
    %v579 = vunpack.c.h.b16 %v273
    %v580 = vunpack.c.l.b16 %v274
    %v581 = vunpack.c.h.b16 %v274
    %v582 = vunpack.c.l.b16 %v275
    %v583 = vunpack.c.h.b16 %v275
    %v584 = vunpack.c.l.b16 %v276
    %v585 = vunpack.c.h.b16 %v276
    %v586 = vunpack.c.l.b16 %v277
    %v587 = vunpack.c.h.b16 %v277
    %v588 = vunpack.c.l.b16 %v278
    %v589 = vunpack.c.h.b16 %v278
    %v590 = vunpack.c.l.b16 %v279
    %v591 = vunpack.c.h.b16 %v279
    %v592 = vunpack.c.l.b16 %v280
    %v593 = vunpack.c.h.b16 %v280
    %v594 = vunpack.c.l.b16 %v281
    %v595 = vunpack.c.h.b16 %v281
    %v596 = vunpack.c.l.b16 %v282
    %v597 = vunpack.c.h.b16 %v282
    %v598 = vunpack.c.l.b16 %v283
    %v599 = vunpack.c.h.b16 %v283
    %v600 = vunpack.c.l.b16 %v284
    %v601 = vunpack.c.h.b16 %v284
    %v602 = vunpack.c.l.b16 %v285
    %v603 = vunpack.c.h.b16 %v285
    %v604 = vunpack.c.l.b16 %v286
    %v605 = vunpack.c.h.b16 %v286
    %v606 = vunpack.c.l.b16 %v287
    %v607 = vunpack.c.h.b16 %v287
    %v608 = vunpack.c.l.b16 %v288
    %v609 = vunpack.c.h.b16 %v288
    %v610 = vunpack.c.l.b16 %v289
    %v611 = vunpack.c.h.b16 %v289
    %v612 = vunpack.c.l.b16 %v290
    %v613 = vunpack.c.h.b16 %v290
    %v614 = vunpack.c.l.b16 %v291
    %v615 = vunpack.c.h.b16 %v291
    %v616 = vunpack.c.l.b16 %v292
    %v617 = vunpack.c.h.b16 %v292
    %v618 = vunpack.c.l.b16 %v293
    %v619 = vunpack.c.h.b16 %v293
    %v620 = vunpack.c.l.b16 %v294
    %v621 = vunpack.c.h.b16 %v294
    %v622 = vunpack.c.l.b16 %v295
    %v623 = vunpack.c.h.b16 %v295
    %v624 = vunpack.c.l.b16 %v296
    %v625 = vunpack.c.h.b16 %v296
    %v626 = vunpack.c.l.b16 %v297
    %v627 = vunpack.c.h.b16 %v297
    %v628 = vunpack.c.l.b16 %v298
    %v629 = vunpack.c.h.b16 %v298
    %v630 = vunpack.c.l.b16 %v299
    %v631 = vunpack.c.h.b16 %v299
    %v632 = vunpack.c.l.b16 %v300
    %v633 = vunpack.c.h.b16 %v300
    %v634 = vunpack.c.l.b16 %v301
    %v635 = vunpack.c.h.b16 %v301
    %v636 = vunpack.c.l.b16 %v302
    %v637 = vunpack.c.h.b16 %v302
    %v638 = vunpack.c.l.b16 %v303
    %v639 = vunpack.c.h.b16 %v303
    %v640 = vunpack.c.l.b16 %v304
    %v641 = vunpack.c.h.b16 %v304
    %v642 = vunpack.c.l.b16 %v305
    %v643 = vunpack.c.h.b16 %v305
    %v644 = vunpack.c.l.b16 %v306
    %v645 = vunpack.c.h.b16 %v306
    %v646 = vunpack.c.l.b16 %v307
    %v647 = vunpack.c.h.b16 %v307
    %v648 = vunpack.c.l.b16 %v308
    %v649 = vunpack.c.h.b16 %v308
    %v650 = vunpack.c.l.b16 %v309
    %v651 = vunpack.c.h.b16 %v309
    %v652 = vunpack.c.l.b16 %v310
    %v653 = vunpack.c.h.b16 %v310
    %v654 = vunpack.c.l.b16 %v311
    %v655 = vunpack.c.h.b16 %v311
    %v656 = vunpack.c.l.b16 %v312
    %v657 = vunpack.c.h.b16 %v312
    %v658 = vunpack.c.l.b16 %v313
    %v659 = vunpack.c.h.b16 %v313
    %v660 = vunpack.c.l.b16 %v314
    %v661 = vunpack.c.h.b16 %v314
    %v662 = vunpack.c.l.b16 %v315
    %v663 = vunpack.c.h.b16 %v315
    %v664 = vunpack.c.l.b16 %v316
    %v665 = vunpack.c.h.b16 %v316
    %v666 = vunpack.c.l.b16 %v317
    %v667 = vunpack.c.h.b16 %v317
    %v668 = vunpack.c.l.b16 %v318
    %v669 = vunpack.c.h.b16 %v318
    %v670 = vunpack.c.l.b16 %v319
    %v671 = vunpack.c.h.b16 %v319
    %v672 = vunpack.c.l.b16 %v320
    %v673 = vunpack.c.h.b16 %v320
    %v674 = vunpack.c.l.b16 %v321
    %v675 = vunpack.c.h.b16 %v321
    %v676 = vunpack.c.l.b16 %v322
    %v677 = vunpack.c.h.b16 %v322
    %v678 = vunpack.c.l.b16 %v323
    %v679 = vunpack.c.h.b16 %v323
    %v680 = vunpack.c.l.b16 %v324
    %v681 = vunpack.c.h.b16 %v324
    %v682 = vunpack.c.l.b16 %v325
    %v683 = vunpack.c.h.b16 %v325
    %v684 = vunpack.c.l.b16 %v326
    %v685 = vunpack.c.h.b16 %v326
    %v686 = vunpack.c.l.b16 %v327
    %v687 = vunpack.c.h.b16 %v327
    %v688 = vunpack.c.l.b16 %v328
    %v689 = vunpack.c.h.b16 %v328
    %v690 = vunpack.c.l.b16 %v329
    %v691 = vunpack.c.h.b16 %v329
    %v692 = vunpack.c.l.b16 %v330
    %v693 = vunpack.c.h.b16 %v330
    %v694 = vunpack.c.l.b16 %v331
    %v695 = vunpack.c.h.b16 %v331
    %v696 = vunpack.c.l.b16 %v332
    %v697 = vunpack.c.h.b16 %v332
    %v698 = vunpack.c.l.b16 %v333
    %v699 = vunpack.c.h.b16 %v333
    %v700 = vunpack.c.l.b16 %v334
    %v701 = vunpack.c.h.b16 %v334
    %v702 = vunpack.c.l.b16 %v335
    %v703 = vunpack.c.h.b16 %v335
    %v704 = vunpack.c.l.b16 %v336
    %v705 = vunpack.c.h.b16 %v336
    %v706 = vunpack.c.l.b16 %v337
    %v707 = vunpack.c.h.b16 %v337
    %v708 = vunpack.c.l.b16 %v338
    %v709 = vunpack.c.h.b16 %v338
    %v710 = vunpack.c.l.b16 %v339
    %v711 = vunpack.c.h.b16 %v339
    %v712 = vunpack.c.l.b16 %v340
    %v713 = vunpack.c.h.b16 %v340
    %v714 = vunpack.c.l.b16 %v341
    %v715 = vunpack.c.h.b16 %v341
    %v716 = vunpack.c.l.b16 %v342
    %v717 = vunpack.c.h.b16 %v342
    %v718 = vunpack.c.l.b16 %v343
    %v719 = vunpack.c.h.b16 %v343
    %v720 = vunpack.c.l.b16 %v344
    %v721 = vunpack.c.h.b16 %v344
    %v722 = vunpack.c.l.b16 %v345
    %v723 = vunpack.c.h.b16 %v345
    %v724 = vunpack.c.l.b16 %v346
    %v725 = vunpack.c.h.b16 %v346
    %v726 = vunpack.c.l.b16 %v347
    %v727 = vunpack.c.h.b16 %v347
    %v728 = vunpack.c.l.b16 %v348
    %v729 = vunpack.c.h.b16 %v348
    %v730 = vunpack.c.l.b16 %v349
    %v731 = vunpack.c.h.b16 %v349
    %v732 = vunpack.c.l.b16 %v350
    %v733 = vunpack.c.h.b16 %v350
    %v734 = vunpack.c.l.b16 %v351
    %v735 = vunpack.c.h.b16 %v351
    %v736 = vunpack.c.l.b16 %v352
    %v737 = vunpack.c.h.b16 %v352
    %v738 = vunpack.c.l.b16 %v353
    %v739 = vunpack.c.h.b16 %v353
    %v740 = vunpack.c.l.b16 %v354
    %v741 = vunpack.c.h.b16 %v354
    %v742 = vunpack.c.l.b16 %v355
    %v743 = vunpack.c.h.b16 %v355
    %v744 = vunpack.c.l.b16 %v356
    %v745 = vunpack.c.h.b16 %v356
    %v746 = vunpack.c.l.b16 %v357
    %v747 = vunpack.c.h.b16 %v357
    %v748 = vunpack.c.l.b16 %v358
    %v749 = vunpack.c.h.b16 %v358
    %v750 = vunpack.c.l.b16 %v359
    %v751 = vunpack.c.h.b16 %v359
    %v752 = vunpack.c.l.b16 %v360
    %v753 = vunpack.c.h.b16 %v360
    %v754 = vunpack.c.l.b16 %v361
    %v755 = vunpack.c.h.b16 %v361
    %v756 = vunpack.c.l.b16 %v362
    %v757 = vunpack.c.h.b16 %v362
    %v758 = vunpack.c.l.b16 %v363
    %v759 = vunpack.c.h.b16 %v363
    %v760 = vunpack.c.l.b16 %v364
    %v761 = vunpack.c.h.b16 %v364
    %v762 = vunpack.c.l.b16 %v365
    %v763 = vunpack.c.h.b16 %v365
    %v764 = vunpack.c.l.b16 %v366
    %v765 = vunpack.c.h.b16 %v366
    %v766 = vunpack.c.l.b16 %v367
    %v767 = vunpack.c.h.b16 %v367
    %v768 = vunpack.c.l.b16 %v368
    %v769 = vunpack.c.h.b16 %v368
    %v770 = vunpack.c.l.b16 %v369
    %v771 = vunpack.c.h.b16 %v369
    %v772 = vunpack.c.l.b16 %v370
    %v773 = vunpack.c.h.b16 %v370
    %v774 = vunpack.c.l.b16 %v371
    %v775 = vunpack.c.h.b16 %v371
    %v776 = vunpack.c.l.b16 %v372
    %v777 = vunpack.c.h.b16 %v372
    %v778 = vunpack.c.l.b16 %v373
    %v779 = vunpack.c.h.b16 %v373
    %v780 = vpack.c.b16 %v528, %v524
    %v781 = vpack.c.b16 %v529, %v525
    %v782 = vpack.c.b16 %v530, %v526
    %v783 = vpack.c.b16 %v531, %v527
    %v784 = vpack.c.b16 %v536, %v532
    %v785 = vpack.c.b16 %v537, %v533
    %v786 = vpack.c.b16 %v538, %v534
    %v787 = vpack.c.b16 %v539, %v535
    %v788 = vpack.c.b16 %v544, %v540
    %v789 = vpack.c.b16 %v545, %v541
    %v790 = vpack.c.b16 %v546, %v542
    %v791 = vpack.c.b16 %v547, %v543
    %v792 = vpack.c.b16 %v552, %v548
    %v793 = vpack.c.b16 %v553, %v549
    %v794 = vpack.c.b16 %v554, %v550
    %v795 = vpack.c.b16 %v555, %v551
    %v796 = vpack.c.b16 %v560, %v556
    %v797 = vpack.c.b16 %v561, %v557
    %v798 = vpack.c.b16 %v562, %v558
    %v799 = vpack.c.b16 %v563, %v559
    %v800 = vpack.c.b16 %v568, %v564
    %v801 = vpack.c.b16 %v569, %v565
    %v802 = vpack.c.b16 %v570, %v566
    %v803 = vpack.c.b16 %v571, %v567
    %v804 = vpack.c.b16 %v576, %v572
    %v805 = vpack.c.b16 %v577, %v573
    %v806 = vpack.c.b16 %v578, %v574
    %v807 = vpack.c.b16 %v579, %v575
    %v808 = vpack.c.b16 %v584, %v580
    %v809 = vpack.c.b16 %v585, %v581
    %v810 = vpack.c.b16 %v586, %v582
    %v811 = vpack.c.b16 %v587, %v583
    %v812 = vpack.c.b16 %v592, %v588
    %v813 = vpack.c.b16 %v593, %v589
    %v814 = vpack.c.b16 %v594, %v590
    %v815 = vpack.c.b16 %v595, %v591
    %v816 = vpack.c.b16 %v600, %v596
    %v817 = vpack.c.b16 %v601, %v597
    %v818 = vpack.c.b16 %v602, %v598
    %v819 = vpack.c.b16 %v603, %v599
    %v820 = vpack.c.b16 %v608, %v604
    %v821 = vpack.c.b16 %v609, %v605
    %v822 = vpack.c.b16 %v610, %v606
    %v823 = vpack.c.b16 %v611, %v607
    %v824 = vpack.c.b16 %v616, %v612
    %v825 = vpack.c.b16 %v617, %v613
    %v826 = vpack.c.b16 %v618, %v614
    %v827 = vpack.c.b16 %v619, %v615
    %v828 = vpack.c.b16 %v624, %v620
    %v829 = vpack.c.b16 %v625, %v621
    %v830 = vpack.c.b16 %v626, %v622
    %v831 = vpack.c.b16 %v627, %v623
    %v832 = vpack.c.b16 %v632, %v628
    %v833 = vpack.c.b16 %v633, %v629
    %v834 = vpack.c.b16 %v634, %v630
    %v835 = vpack.c.b16 %v635, %v631
    %v836 = vpack.c.b16 %v640, %v636
    %v837 = vpack.c.b16 %v641, %v637
    %v838 = vpack.c.b16 %v642, %v638
    %v839 = vpack.c.b16 %v643, %v639
    %v840 = vpack.c.b16 %v648, %v644
    %v841 = vpack.c.b16 %v649, %v645
    %v842 = vpack.c.b16 %v650, %v646
    %v843 = vpack.c.b16 %v651, %v647
    %v844 = vpack.c.b16 %v656, %v652
    %v845 = vpack.c.b16 %v657, %v653
    %v846 = vpack.c.b16 %v658, %v654
    %v847 = vpack.c.b16 %v659, %v655
    %v848 = vpack.c.b16 %v664, %v660
    %v849 = vpack.c.b16 %v665, %v661
    %v850 = vpack.c.b16 %v666, %v662
    %v851 = vpack.c.b16 %v667, %v663
    %v852 = vpack.c.b16 %v672, %v668
    %v853 = vpack.c.b16 %v673, %v669
    %v854 = vpack.c.b16 %v674, %v670
    %v855 = vpack.c.b16 %v675, %v671
    %v856 = vpack.c.b16 %v680, %v676
    %v857 = vpack.c.b16 %v681, %v677
    %v858 = vpack.c.b16 %v682, %v678
    %v859 = vpack.c.b16 %v683, %v679
    %v860 = vpack.c.b16 %v688, %v684
    %v861 = vpack.c.b16 %v689, %v685
    %v862 = vpack.c.b16 %v690, %v686
    %v863 = vpack.c.b16 %v691, %v687
    %v864 = vpack.c.b16 %v696, %v692
    %v865 = vpack.c.b16 %v697, %v693
    %v866 = vpack.c.b16 %v698, %v694
    %v867 = vpack.c.b16 %v699, %v695
    %v868 = vpack.c.b16 %v704, %v700
    %v869 = vpack.c.b16 %v705, %v701
    %v870 = vpack.c.b16 %v706, %v702
    %v871 = vpack.c.b16 %v707, %v703
    %v872 = vpack.c.b16 %v712, %v708
    %v873 = vpack.c.b16 %v713, %v709
    %v874 = vpack.c.b16 %v714, %v710
    %v875 = vpack.c.b16 %v715, %v711
    %v876 = vpack.c.b16 %v720, %v716
    %v877 = vpack.c.b16 %v721, %v717
    %v878 = vpack.c.b16 %v722, %v718
    %v879 = vpack.c.b16 %v723, %v719
    %v880 = vpack.c.b16 %v728, %v724
    %v881 = vpack.c.b16 %v729, %v725
    %v882 = vpack.c.b16 %v730, %v726
    %v883 = vpack.c.b16 %v731, %v727
    %v884 = vpack.c.b16 %v736, %v732
    %v885 = vpack.c.b16 %v737, %v733
    %v886 = vpack.c.b16 %v738, %v734
    %v887 = vpack.c.b16 %v739, %v735
    %v888 = vpack.c.b16 %v744, %v740
    %v889 = vpack.c.b16 %v745, %v741
    %v890 = vpack.c.b16 %v746, %v742
    %v891 = vpack.c.b16 %v747, %v743
    %v892 = vpack.c.b16 %v752, %v748
    %v893 = vpack.c.b16 %v753, %v749
    %v894 = vpack.c.b16 %v754, %v750
    %v895 = vpack.c.b16 %v755, %v751
    %v896 = vpack.c.b16 %v760, %v756
    %v897 = vpack.c.b16 %v761, %v757
    %v898 = vpack.c.b16 %v762, %v758
    %v899 = vpack.c.b16 %v763, %v759
    %v900 = vpack.c.b16 %v768, %v764
    %v901 = vpack.c.b16 %v769, %v765
    %v902 = vpack.c.b16 %v770, %v766
    %v903 = vpack.c.b16 %v771, %v767
    %v904 = vpack.c.b16 %v776, %v772
    %v905 = vpack.c.b16 %v777, %v773
    %v906 = vpack.c.b16 %v778, %v774
    %v907 = vpack.c.b16 %v779, %v775
    %1036 = vmatprep.subr.bf16.mxu0 %v781
    %1037 = vmatpush1.bf16.msra.mxu0 %v780
    %1038 = vmatprep.subr.bf16.mxu0 %v785
    %1039 = vmatpush1.bf16.msra.mxu0 %v784
    %1040 = vmatprep.subr.bf16.mxu0 %v789
    %1041 = vmatpush1.bf16.msra.mxu0 %v788
    %1042 = vmatprep.subr.bf16.mxu0 %v793
    %1043 = vmatpush1.bf16.msra.mxu0 %v792
    %1044 = vmatprep.subr.bf16.mxu0 %v797
    %1045 = vmatpush1.bf16.msra.mxu0 %v796
    %1046 = vmatprep.subr.bf16.mxu0 %v801
    %1047 = vmatpush1.bf16.msra.mxu0 %v800
    %1048 = vmatprep.subr.bf16.mxu0 %v805
    %1049 = vmatpush1.bf16.msra.mxu0 %v804
    %1050 = vmatprep.subr.bf16.mxu0 %v809
    %1051 = vmatpush1.bf16.msra.mxu0 %v808
    %1052 = vmatprep.subr.bf16.mxu0 %v813
    %1053 = vmatpush1.bf16.msra.mxu0 %v812
    %1054 = vmatprep.subr.bf16.mxu0 %v817
    %1055 = vmatpush1.bf16.msra.mxu0 %v816
    %1056 = vmatprep.subr.bf16.mxu0 %v821
    %1057 = vmatpush1.bf16.msra.mxu0 %v820
    %1058 = vmatprep.subr.bf16.mxu0 %v825
    %1059 = vmatpush1.bf16.msra.mxu0 %v824
    %1060 = vmatprep.subr.bf16.mxu0 %v829
    %1061 = vmatpush1.bf16.msra.mxu0 %v828
    %1062 = vmatprep.subr.bf16.mxu0 %v833
    %1063 = vmatpush1.bf16.msra.mxu0 %v832
    %1064 = vmatprep.subr.bf16.mxu0 %v837
    %1065 = vmatpush1.bf16.msra.mxu0 %v836
    %1066 = vmatprep.subr.bf16.mxu0 %v841
    %1067 = vmatpush1.bf16.msra.mxu0 %v840
    %1068 = vmatprep.mubr.bf16.mxu0 %v243
    %1069 = vmatmul.mubr.bf16.gmra.mrb[0].mxu0 %v242
    %v1070 = vpop.f32.mrb[0].mxu0
    %v1071 = vadd.f32 %v379, %v1070
    %v1072 = vpop.f32.mrb[0].mxu0
    %v1073 = vadd.f32 %v383, %v1072
    %v1074 = vpop.f32.mrb[0].mxu0
    %v1075 = vpop.f32.mrb[0].mxu0
    %1076 = vdwg.mxu0
    %1077 = vmatprep.subr.bf16.mxu0 %v845
    %1078 = vmatpush1.bf16.msra.mxu0 %v844
    %1079 = vmatprep.subr.bf16.mxu0 %v849
    %1080 = vmatpush1.bf16.msra.mxu0 %v848
    %1081 = vmatprep.subr.bf16.mxu0 %v853
    %1082 = vmatpush1.bf16.msra.mxu0 %v852
    %1083 = vmatprep.subr.bf16.mxu0 %v857
    %1084 = vmatpush1.bf16.msra.mxu0 %v856
    %1085 = vmatprep.subr.bf16.mxu0 %v861
    %1086 = vmatpush1.bf16.msra.mxu0 %v860
    %1087 = vmatprep.subr.bf16.mxu0 %v865
    %1088 = vmatpush1.bf16.msra.mxu0 %v864
    %1089 = vmatprep.subr.bf16.mxu0 %v869
    %1090 = vmatpush1.bf16.msra.mxu0 %v868
    %1091 = vmatprep.subr.bf16.mxu0 %v873
    %1092 = vmatpush1.bf16.msra.mxu0 %v872
    %1093 = vmatprep.subr.bf16.mxu0 %v877
    %1094 = vmatpush1.bf16.msra.mxu0 %v876
    %1095 = vmatprep.subr.bf16.mxu0 %v881
    %1096 = vmatpush1.bf16.msra.mxu0 %v880
    %1097 = vmatprep.subr.bf16.mxu0 %v885
    %1098 = vmatpush1.bf16.msra.mxu0 %v884
    %1099 = vmatprep.subr.bf16.mxu0 %v889
    %1100 = vmatpush1.bf16.msra.mxu0 %v888
    %1101 = vmatprep.subr.bf16.mxu0 %v893
    %1102 = vmatpush1.bf16.msra.mxu0 %v892
    %1103 = vmatprep.subr.bf16.mxu0 %v897
    %1104 = vmatpush1.bf16.msra.mxu0 %v896
    %1105 = vmatprep.subr.bf16.mxu0 %v901
    %1106 = vmatpush1.bf16.msra.mxu0 %v900
    %1107 = vmatprep.subr.bf16.mxu0 %v905
    %1108 = vmatpush1.bf16.msra.mxu0 %v904
    %1109 = vmatprep.mubr.bf16.mxu0 %v245
    %1110 = vmatmul.mubr.bf16.gmra.mrb[0].mxu0 %v244
    %v1111 = vpop.f32.mrb[0].mxu0
    %v1112 = vadd.f32 %v1071, %v1111
    %v1113 = vpop.f32.mrb[0].mxu0
    %v1114 = vadd.f32 %v1073, %v1113
    %v1115 = vpop.f32.mrb[0].mxu0
    %v1116 = vpop.f32.mrb[0].mxu0
    %1117 = vdwg.mxu0
    %1118 = vmatprep.subr.bf16.mxu0 %v783
    %1119 = vmatpush1.bf16.msra.mxu0 %v782
    %1120 = vmatprep.subr.bf16.mxu0 %v787
    %1121 = vmatpush1.bf16.msra.mxu0 %v786
    %1122 = vmatprep.subr.bf16.mxu0 %v791
    %1123 = vmatpush1.bf16.msra.mxu0 %v790
    %1124 = vmatprep.subr.bf16.mxu0 %v795
    %1125 = vmatpush1.bf16.msra.mxu0 %v794
    %1126 = vmatprep.subr.bf16.mxu0 %v799
    %1127 = vmatpush1.bf16.msra.mxu0 %v798
    %1128 = vmatprep.subr.bf16.mxu0 %v803
    %1129 = vmatpush1.bf16.msra.mxu0 %v802
    %1130 = vmatprep.subr.bf16.mxu0 %v807
    %1131 = vmatpush1.bf16.msra.mxu0 %v806
    %1132 = vmatprep.subr.bf16.mxu0 %v811
    %1133 = vmatpush1.bf16.msra.mxu0 %v810
    %1134 = vmatprep.subr.bf16.mxu0 %v815
    %1135 = vmatpush1.bf16.msra.mxu0 %v814
    %1136 = vmatprep.subr.bf16.mxu0 %v819
    %1137 = vmatpush1.bf16.msra.mxu0 %v818
    %1138 = vmatprep.subr.bf16.mxu0 %v823
    %1139 = vmatpush1.bf16.msra.mxu0 %v822
    %1140 = vmatprep.subr.bf16.mxu0 %v827
    %1141 = vmatpush1.bf16.msra.mxu0 %v826
    %1142 = vmatprep.subr.bf16.mxu0 %v831
    %1143 = vmatpush1.bf16.msra.mxu0 %v830
    %1144 = vmatprep.subr.bf16.mxu0 %v835
    %1145 = vmatpush1.bf16.msra.mxu0 %v834
    %1146 = vmatprep.subr.bf16.mxu0 %v839
    %1147 = vmatpush1.bf16.msra.mxu0 %v838
    %1148 = vmatprep.subr.bf16.mxu0 %v843
    %1149 = vmatpush1.bf16.msra.mxu0 %v842
    %1150 = vmatprep.mubr.bf16.mxu0 %v243
    %1151 = vmatmul.mubr.bf16.gmra.mrb[0].mxu0 %v242
    %v1152 = vpop.f32.mrb[0].mxu0
    %v1153 = vadd.f32 %v387, %v1152
    %v1154 = vpop.f32.mrb[0].mxu0
    %v1155 = vadd.f32 %v391, %v1154
    %v1156 = vpop.f32.mrb[0].mxu0
    %v1157 = vpop.f32.mrb[0].mxu0
    %1158 = vdwg.mxu0
    %1159 = vmatprep.subr.bf16.mxu0 %v847
    %1160 = vmatpush1.bf16.msra.mxu0 %v846
    %1161 = vmatprep.subr.bf16.mxu0 %v851
    %1162 = vmatpush1.bf16.msra.mxu0 %v850
    %1163 = vmatprep.subr.bf16.mxu0 %v855
    %1164 = vmatpush1.bf16.msra.mxu0 %v854
    %1165 = vmatprep.subr.bf16.mxu0 %v859
    %1166 = vmatpush1.bf16.msra.mxu0 %v858
    %1167 = vmatprep.subr.bf16.mxu0 %v863
    %1168 = vmatpush1.bf16.msra.mxu0 %v862
    %1169 = vmatprep.subr.bf16.mxu0 %v867
    %1170 = vmatpush1.bf16.msra.mxu0 %v866
    %1171 = vmatprep.subr.bf16.mxu0 %v871
    %1172 = vmatpush1.bf16.msra.mxu0 %v870
    %1173 = vmatprep.subr.bf16.mxu0 %v875
    %1174 = vmatpush1.bf16.msra.mxu0 %v874
    %1175 = vmatprep.subr.bf16.mxu0 %v879
    %1176 = vmatpush1.bf16.msra.mxu0 %v878
    %1177 = vmatprep.subr.bf16.mxu0 %v883
    %1178 = vmatpush1.bf16.msra.mxu0 %v882
    %1179 = vmatprep.subr.bf16.mxu0 %v887
    %1180 = vmatpush1.bf16.msra.mxu0 %v886
    %1181 = vmatprep.subr.bf16.mxu0 %v891
    %1182 = vmatpush1.bf16.msra.mxu0 %v890
    %1183 = vmatprep.subr.bf16.mxu0 %v895
    %1184 = vmatpush1.bf16.msra.mxu0 %v894
    %1185 = vmatprep.subr.bf16.mxu0 %v899
    %1186 = vmatpush1.bf16.msra.mxu0 %v898
    %1187 = vmatprep.subr.bf16.mxu0 %v903
    %1188 = vmatpush1.bf16.msra.mxu0 %v902
    %1189 = vmatprep.subr.bf16.mxu0 %v907
    %1190 = vmatpush1.bf16.msra.mxu0 %v906
    %1191 = vmatprep.mubr.bf16.mxu0 %v245
    %1192 = vmatmul.mubr.bf16.gmra.mrb[0].mxu0 %v244
    %v1193 = vpop.f32.mrb[0].mxu0
    %v1194 = vadd.f32 %v1153, %v1193
    %v1195 = vpop.f32.mrb[0].mxu0
    %v1196 = vadd.f32 %v1155, %v1195
    %v1197 = vpop.f32.mrb[0].mxu0
    %v1198 = vpop.f32.mrb[0].mxu0
    %1199 = vdwg.mxu0
    %v1200 = vmax.f32 %v1112, 0.0
    %v1201 = vmax.f32 %v1114, 0.0
    %v1202 = vmax.f32 %v1194, 0.0
    %v1203 = vmax.f32 %v1196, 0.0
    %v1204 = vpack.c.bf16 %v1200, %v1200
    %v1205 = vpack.c.bf16 %v1201, %v1201
    %v1206 = vpack.c.bf16 %v1202, %v1202
    %v1207 = vpack.c.bf16 %v1203, %v1203
    %v1208 = vld [vmem:[#allocation8] sm:$0xf]
    %v1209 = vld [vmem:[#allocation8 + $0x4] sm:$0xf]
    %v1210 = vld [vmem:[#allocation8 + $0x8] sm:$0xf]
    %v1211 = vld [vmem:[#allocation8 + $0xc] sm:$0xf]
    %v1212 = vld [vmem:[#allocation8 + $0x10] sm:$0xf]
    %v1213 = vld [vmem:[#allocation8 + $0x14] sm:$0xf]
    %v1214 = vld [vmem:[#allocation8 + $0x18] sm:$0xf]
    %v1215 = vld [vmem:[#allocation8 + $0x1c] sm:$0xf]
    %v1216 = vld [vmem:[#allocation8 + $0x20] sm:$0xf]
    %v1217 = vld [vmem:[#allocation8 + $0x24] sm:$0xf]
    %v1218 = vld [vmem:[#allocation8 + $0x28] sm:$0xf]
    %v1219 = vld [vmem:[#allocation8 + $0x2c] sm:$0xf]
    %v1220 = vld [vmem:[#allocation8 + $0x30] sm:$0xf]
    %v1221 = vld [vmem:[#allocation8 + $0x34] sm:$0xf]
    %v1222 = vld [vmem:[#allocation8 + $0x38] sm:$0xf]
    %v1223 = vld [vmem:[#allocation8 + $0x3c] sm:$0xf]
    %v1224 = vld [vmem:[#allocation8 + $0x40] sm:$0xf]
    %v1225 = vld [vmem:[#allocation8 + $0x44] sm:$0xf]
    %v1226 = vld [vmem:[#allocation8 + $0x48] sm:$0xf]
    %v1227 = vld [vmem:[#allocation8 + $0x4c] sm:$0xf]
    %v1228 = vld [vmem:[#allocation8 + $0x50] sm:$0xf]
    %v1229 = vld [vmem:[#allocation8 + $0x54] sm:$0xf]
    %v1230 = vld [vmem:[#allocation8 + $0x58] sm:$0xf]
    %v1231 = vld [vmem:[#allocation8 + $0x5c] sm:$0xf]
    %v1232 = vld [vmem:[#allocation8 + $0x60] sm:$0xf]
    %v1233 = vld [vmem:[#allocation8 + $0x64] sm:$0xf]
    %v1234 = vld [vmem:[#allocation8 + $0x68] sm:$0xf]
    %v1235 = vld [vmem:[#allocation8 + $0x6c] sm:$0xf]
    %v1236 = vld [vmem:[#allocation8 + $0x70] sm:$0xf]
    %v1237 = vld [vmem:[#allocation8 + $0x74] sm:$0xf]
    %v1238 = vld [vmem:[#allocation8 + $0x78] sm:$0xf]
    %v1239 = vld [vmem:[#allocation8 + $0x7c] sm:$0xf]
    %v1240 = vld [vmem:[#allocation8 + $0x80] sm:$0xf]
    %v1241 = vld [vmem:[#allocation8 + $0x84] sm:$0xf]
    %v1242 = vld [vmem:[#allocation8 + $0x88] sm:$0xf]
    %v1243 = vld [vmem:[#allocation8 + $0x8c] sm:$0xf]
    %v1244 = vld [vmem:[#allocation8 + $0x90] sm:$0xf]
    %v1245 = vld [vmem:[#allocation8 + $0x94] sm:$0xf]
    %v1246 = vld [vmem:[#allocation8 + $0x98] sm:$0xf]
    %v1247 = vld [vmem:[#allocation8 + $0x9c] sm:$0xf]
    %v1248 = vld [vmem:[#allocation8 + $0xa0] sm:$0xf]
    %v1249 = vld [vmem:[#allocation8 + $0xa4] sm:$0xf]
    %v1250 = vld [vmem:[#allocation8 + $0xa8] sm:$0xf]
    %v1251 = vld [vmem:[#allocation8 + $0xac] sm:$0xf]
    %v1252 = vld [vmem:[#allocation8 + $0xb0] sm:$0xf]
    %v1253 = vld [vmem:[#allocation8 + $0xb4] sm:$0xf]
    %v1254 = vld [vmem:[#allocation8 + $0xb8] sm:$0xf]
    %v1255 = vld [vmem:[#allocation8 + $0xbc] sm:$0xf]
    %v1256 = vld [vmem:[#allocation8 + $0xc0] sm:$0xf]
    %v1257 = vld [vmem:[#allocation8 + $0xc4] sm:$0xf]
    %v1258 = vld [vmem:[#allocation8 + $0xc8] sm:$0xf]
    %v1259 = vld [vmem:[#allocation8 + $0xcc] sm:$0xf]
    %v1260 = vld [vmem:[#allocation8 + $0xd0] sm:$0xf]
    %v1261 = vld [vmem:[#allocation8 + $0xd4] sm:$0xf]
    %v1262 = vld [vmem:[#allocation8 + $0xd8] sm:$0xf]
    %v1263 = vld [vmem:[#allocation8 + $0xdc] sm:$0xf]
    %v1264 = vld [vmem:[#allocation8 + $0xe0] sm:$0xf]
    %v1265 = vld [vmem:[#allocation8 + $0xe4] sm:$0xf]
    %v1266 = vld [vmem:[#allocation8 + $0xe8] sm:$0xf]
    %v1267 = vld [vmem:[#allocation8 + $0xec] sm:$0xf]
    %v1268 = vld [vmem:[#allocation8 + $0xf0] sm:$0xf]
    %v1269 = vld [vmem:[#allocation8 + $0xf4] sm:$0xf]
    %v1270 = vld [vmem:[#allocation8 + $0xf8] sm:$0xf]
    %v1271 = vld [vmem:[#allocation8 + $0xfc] sm:$0xf]
    %v1272 = vld [vmem:[%s6] sm:$0x1]
    %v1274 = vlaneseq
    %v1275 = vshrl.u32 %v1274, 7
    %v1276 = vsub.s32 0, %v1275
    %v1277 = vrot.slane %v1272, %v1276
    %v1343 = vunpack.c.l.b16 %v1208
    %v1344 = vunpack.c.l.b16 %v1209
    %v1345 = vunpack.c.l.b16 %v1210
    %v1346 = vunpack.c.l.b16 %v1211
    %v1347 = vunpack.c.l.b16 %v1212
    %v1348 = vunpack.c.l.b16 %v1213
    %v1349 = vunpack.c.l.b16 %v1214
    %v1350 = vunpack.c.l.b16 %v1215
    %v1351 = vunpack.c.l.b16 %v1216
    %v1352 = vunpack.c.l.b16 %v1217
    %v1353 = vunpack.c.l.b16 %v1218
    %v1354 = vunpack.c.l.b16 %v1219
    %v1355 = vunpack.c.l.b16 %v1220
    %v1356 = vunpack.c.l.b16 %v1221
    %v1357 = vunpack.c.l.b16 %v1222
    %v1358 = vunpack.c.l.b16 %v1223
    %v1359 = vunpack.c.l.b16 %v1224
    %v1360 = vunpack.c.l.b16 %v1225
    %v1361 = vunpack.c.l.b16 %v1226
    %v1362 = vunpack.c.l.b16 %v1227
    %v1363 = vunpack.c.l.b16 %v1228
    %v1364 = vunpack.c.l.b16 %v1229
    %v1365 = vunpack.c.l.b16 %v1230
    %v1366 = vunpack.c.l.b16 %v1231
    %v1367 = vunpack.c.l.b16 %v1232
    %v1368 = vunpack.c.l.b16 %v1233
    %v1369 = vunpack.c.l.b16 %v1234
    %v1370 = vunpack.c.l.b16 %v1235
    %v1371 = vunpack.c.l.b16 %v1236
    %v1372 = vunpack.c.l.b16 %v1237
    %v1373 = vunpack.c.l.b16 %v1238
    %v1374 = vunpack.c.l.b16 %v1239
    %v1375 = vunpack.c.l.b16 %v1240
    %v1376 = vunpack.c.l.b16 %v1241
    %v1377 = vunpack.c.l.b16 %v1242
    %v1378 = vunpack.c.l.b16 %v1243
    %v1379 = vunpack.c.l.b16 %v1244
    %v1380 = vunpack.c.l.b16 %v1245
    %v1381 = vunpack.c.l.b16 %v1246
    %v1382 = vunpack.c.l.b16 %v1247
    %v1383 = vunpack.c.l.b16 %v1248
    %v1384 = vunpack.c.l.b16 %v1249
    %v1385 = vunpack.c.l.b16 %v1250
    %v1386 = vunpack.c.l.b16 %v1251
    %v1387 = vunpack.c.l.b16 %v1252
    %v1388 = vunpack.c.l.b16 %v1253
    %v1389 = vunpack.c.l.b16 %v1254
    %v1390 = vunpack.c.l.b16 %v1255
    %v1391 = vunpack.c.l.b16 %v1256
    %v1392 = vunpack.c.l.b16 %v1257
    %v1393 = vunpack.c.l.b16 %v1258
    %v1394 = vunpack.c.l.b16 %v1259
    %v1395 = vunpack.c.l.b16 %v1260
    %v1396 = vunpack.c.l.b16 %v1261
    %v1397 = vunpack.c.l.b16 %v1262
    %v1398 = vunpack.c.l.b16 %v1263
    %v1399 = vunpack.c.l.b16 %v1264
    %v1400 = vunpack.c.l.b16 %v1265
    %v1401 = vunpack.c.l.b16 %v1266
    %v1402 = vunpack.c.l.b16 %v1267
    %v1403 = vunpack.c.l.b16 %v1268
    %v1404 = vunpack.c.l.b16 %v1269
    %v1405 = vunpack.c.l.b16 %v1270
    %v1406 = vunpack.c.l.b16 %v1271
    %v1407 = vpack.c.b16 %v1344, %v1343
    %v1408 = vpack.c.b16 %v1346, %v1345
    %v1409 = vpack.c.b16 %v1348, %v1347
    %v1410 = vpack.c.b16 %v1350, %v1349
    %v1411 = vpack.c.b16 %v1352, %v1351
    %v1412 = vpack.c.b16 %v1354, %v1353
    %v1413 = vpack.c.b16 %v1356, %v1355
    %v1414 = vpack.c.b16 %v1358, %v1357
    %v1415 = vpack.c.b16 %v1360, %v1359
    %v1416 = vpack.c.b16 %v1362, %v1361
    %v1417 = vpack.c.b16 %v1364, %v1363
    %v1418 = vpack.c.b16 %v1366, %v1365
    %v1419 = vpack.c.b16 %v1368, %v1367
    %v1420 = vpack.c.b16 %v1370, %v1369
    %v1421 = vpack.c.b16 %v1372, %v1371
    %v1422 = vpack.c.b16 %v1374, %v1373
    %v1423 = vpack.c.b16 %v1376, %v1375
    %v1424 = vpack.c.b16 %v1378, %v1377
    %v1425 = vpack.c.b16 %v1380, %v1379
    %v1426 = vpack.c.b16 %v1382, %v1381
    %v1427 = vpack.c.b16 %v1384, %v1383
    %v1428 = vpack.c.b16 %v1386, %v1385
    %v1429 = vpack.c.b16 %v1388, %v1387
    %v1430 = vpack.c.b16 %v1390, %v1389
    %v1431 = vpack.c.b16 %v1392, %v1391
    %v1432 = vpack.c.b16 %v1394, %v1393
    %v1433 = vpack.c.b16 %v1396, %v1395
    %v1434 = vpack.c.b16 %v1398, %v1397
    %v1435 = vpack.c.b16 %v1400, %v1399
    %v1436 = vpack.c.b16 %v1402, %v1401
    %v1437 = vpack.c.b16 %v1404, %v1403
    %v1438 = vpack.c.b16 %v1406, %v1405
    %1471 = vmatprep.subr.bf16.mxu0 0
    %1472 = vmatpush1.bf16.msra.mxu0 %v1407
    %1473 = vmatprep.subr.bf16.mxu0 0
    %1474 = vmatpush1.bf16.msra.mxu0 %v1408
    %1475 = vmatprep.subr.bf16.mxu0 0
    %1476 = vmatpush1.bf16.msra.mxu0 %v1409
    %1477 = vmatprep.subr.bf16.mxu0 0
    %1478 = vmatpush1.bf16.msra.mxu0 %v1410
    %1479 = vmatprep.subr.bf16.mxu0 0
    %1480 = vmatpush1.bf16.msra.mxu0 %v1411
    %1481 = vmatprep.subr.bf16.mxu0 0
    %1482 = vmatpush1.bf16.msra.mxu0 %v1412
    %1483 = vmatprep.subr.bf16.mxu0 0
    %1484 = vmatpush1.bf16.msra.mxu0 %v1413
    %1485 = vmatprep.subr.bf16.mxu0 0
    %1486 = vmatpush1.bf16.msra.mxu0 %v1414
    %1487 = vmatprep.subr.bf16.mxu0 0
    %1488 = vmatpush1.bf16.msra.mxu0 %v1415
    %1489 = vmatprep.subr.bf16.mxu0 0
    %1490 = vmatpush1.bf16.msra.mxu0 %v1416
    %1491 = vmatprep.subr.bf16.mxu0 0
    %1492 = vmatpush1.bf16.msra.mxu0 %v1417
    %1493 = vmatprep.subr.bf16.mxu0 0
    %1494 = vmatpush1.bf16.msra.mxu0 %v1418
    %1495 = vmatprep.subr.bf16.mxu0 0
    %1496 = vmatpush1.bf16.msra.mxu0 %v1419
    %1497 = vmatprep.subr.bf16.mxu0 0
    %1498 = vmatpush1.bf16.msra.mxu0 %v1420
    %1499 = vmatprep.subr.bf16.mxu0 0
    %1500 = vmatpush1.bf16.msra.mxu0 %v1421
    %1501 = vmatprep.subr.bf16.mxu0 0
    %1502 = vmatpush1.bf16.msra.mxu0 %v1422
    %1503 = vmatprep.mubr.bf16.mxu0 %v1205
    %1504 = vmatmul.mubr.bf16.gmra.mrb[0].mxu0 %v1204
    %v1505 = vpop.f32.mrb[0].mxu0
    %v1506 = vadd.f32 %v1277, %v1505
    %v1507 = vpop.f32.mrb[0].mxu0
    %v1508 = vpop.f32.mrb[0].mxu0
    %v1509 = vpop.f32.mrb[0].mxu0
    %1510 = vdwg.mxu0
    %1511 = vmatprep.subr.bf16.mxu0 0
    %1512 = vmatpush1.bf16.msra.mxu0 %v1423
    %1513 = vmatprep.subr.bf16.mxu0 0
    %1514 = vmatpush1.bf16.msra.mxu0 %v1424
    %1515 = vmatprep.subr.bf16.mxu0 0
    %1516 = vmatpush1.bf16.msra.mxu0 %v1425
    %1517 = vmatprep.subr.bf16.mxu0 0
    %1518 = vmatpush1.bf16.msra.mxu0 %v1426
    %1519 = vmatprep.subr.bf16.mxu0 0
    %1520 = vmatpush1.bf16.msra.mxu0 %v1427
    %1521 = vmatprep.subr.bf16.mxu0 0
    %1522 = vmatpush1.bf16.msra.mxu0 %v1428
    %1523 = vmatprep.subr.bf16.mxu0 0
    %1524 = vmatpush1.bf16.msra.mxu0 %v1429
    %1525 = vmatprep.subr.bf16.mxu0 0
    %1526 = vmatpush1.bf16.msra.mxu0 %v1430
    %1527 = vmatprep.subr.bf16.mxu0 0
    %1528 = vmatpush1.bf16.msra.mxu0 %v1431
    %1529 = vmatprep.subr.bf16.mxu0 0
    %1530 = vmatpush1.bf16.msra.mxu0 %v1432
    %1531 = vmatprep.subr.bf16.mxu0 0
    %1532 = vmatpush1.bf16.msra.mxu0 %v1433
    %1533 = vmatprep.subr.bf16.mxu0 0
    %1534 = vmatpush1.bf16.msra.mxu0 %v1434
    %1535 = vmatprep.subr.bf16.mxu0 0
    %1536 = vmatpush1.bf16.msra.mxu0 %v1435
    %1537 = vmatprep.subr.bf16.mxu0 0
    %1538 = vmatpush1.bf16.msra.mxu0 %v1436
    %1539 = vmatprep.subr.bf16.mxu0 0
    %1540 = vmatpush1.bf16.msra.mxu0 %v1437
    %1541 = vmatprep.subr.bf16.mxu0 0
    %1542 = vmatpush1.bf16.msra.mxu0 %v1438
    %1543 = vmatprep.mubr.bf16.mxu0 %v1207
    %1544 = vmatmul.mubr.bf16.gmra.mrb[0].mxu0 %v1206
    %v1545 = vpop.f32.mrb[0].mxu0
    %v1546 = vadd.f32 %v1506, %v1545
    %v1547 = vpop.f32.mrb[0].mxu0
    %v1548 = vpop.f32.mrb[0].mxu0
    %v1549 = vpop.f32.mrb[0].mxu0
    %1550 = vdwg.mxu0
    %1551 = vst [vmem:[#allocation10] sm:$0xff] %v1546
    // Predicated region
    $region46: #{tpu_custom_call.1} parent=1 // pred_check
      _
    $region47: #{tpu_custom_call.1} parent=1 // pred_check_branch
      %1553 = sbr.rel (0) target = $region49
    $region48: #{tpu_custom_call.1} parent=1 // pred_region
      %s1555 = ssub.s32 128, 128
      %1556 = vsyncadd [#allocation4], %s1555
      %s1558 = sshll.u32 [#allocation10], 4
      %s1559 = int_to_ptr.vmem [resolvable:$true] %s1558
      %1561 = dma.vmem_to_hbm [thread:$0]  %s1559, 128, %s7, [#allocation4]
    $region49: #{tpu_custom_call.1} parent=1 // pred_fallthru
      _
    // Predicated region
    $region50: #{tpu_custom_call.1} parent=1 // pred_check
      _
    $region51: #{tpu_custom_call.1} parent=1 // pred_check_branch
      %1563 = sbr.rel (0) target = $region53
    $region52: #{tpu_custom_call.1} parent=1 // pred_region
      %1564 = dma.done [#allocation4], 128
    $region53: #{tpu_custom_call.1} parent=1 // pred_fallthru
      _
    %1565 = vsyncpa [#allocation3], 1
    %1566 = vsyncpa [#allocation6], 1
    %1567 = vsyncpa [#allocation9], 1
    %1568 = vsyncpa [#allocation4], 1

</llo_original>
